<compile_context>
chip_gen: v6e
topology: v6e:2x2x1
jax: 0.10.0
libtpu: 0.0.40
codegen_flags: <defaults>
</compile_context>

<pallas_src>
import functools

import numpy as np
import jax
import jax.numpy as jnp
from jax.experimental import pallas as pl
from jax.experimental.pallas import tpu as pltpu


def _cutout_kernel(x_ref, wy_ref, wxt_ref, o_ref, *, tp, h):
    # x_ref  : (tp*H, W)       bf16  row-stacked image tile (image p -> rows p*H..)
    # wy_ref : (S, H)          bf16  crop+pool matrix over rows (this cutout)
    # wxt_ref: (W, S_pad)      bf16  crop+pool matrix over cols, transposed + lane-padded
    # o_ref  : (tp, S, S_pad)  out dtype
    #
    # Fused matmul #1: contract W for all tp*H rows at once (large M on the MXU).
    t1 = jnp.dot(x_ref[...], wxt_ref[...],
                 preferred_element_type=jnp.float32)            # (tp*H, S_pad) f32
    t1 = t1.astype(wy_ref.dtype)                                # bf16 feed for pass 2
    wy = wy_ref[...]                                            # (S, H)
    # Matmul #2: contract H per image.  Plain 2-D dots on sublane-aligned row
    # slices; stores are lane-dense (S_pad is a multiple of 128).
    for p in range(tp):
        o_ref[p, :, :] = jnp.dot(
            wy, t1[p * h:(p + 1) * h, :],
            preferred_element_type=jnp.float32).astype(o_ref.dtype)


def _adaptive_pool_matrix(in_size, out_size, offset, full_size):
    """Row i averages input rows [floor(i*in/out), ceil((i+1)*in/out)) of the
    cropped window starting at `offset` — exact F.adaptive_avg_pool2d bins."""
    w = np.zeros((out_size, full_size), dtype=np.float32)
    for i in range(out_size):
        start = (i * in_size) // out_size
        end = -((-(i + 1) * in_size) // out_size)   # ceil div
        w[i, offset + start: offset + end] = 1.0 / float(end - start)
    return w


def _step_vmem_bytes(tp, H, W, S, S_pad):
    """Rough per-grid-step VMEM footprint (double-buffered inputs/outputs + t1)."""
    return (2 * tp * H * W * 2                 # x tile, 2 bufs, bf16
            + 2 * (S * H + W * S_pad) * 2      # wy + wxt, 2 bufs, bf16
            + 2 * tp * S * S_pad * 4           # out tile, 2 bufs, f32
            + 2 * tp * H * S_pad * 4)          # t1 intermediate (f32) + slack


def _choose_p_tile(P, H, W, S, S_pad, budget_bytes=20 * 1024 * 1024):
    """Largest tp dividing P whose per-step footprint fits the VMEM budget."""
    if H % 8 != 0:
        return P, 1          # keep block == full array so (8,128) rule is moot
    best = 1
    for tp in range(1, P + 1):
        if P % tp:
            continue
        if _step_vmem_bytes(tp, H, W, S, S_pad) <= budget_bytes:
            best = tp
    return best, P // best


def make_cutouts(x, cut_size, cutn, cut_pow=1.0, seed=0):
    B, C, H, W = x.shape
    P = B * C
    S = cut_size
    S_pad = ((S + 127) // 128) * 128            # lane-dense output stores
    max_size = min(H, W)
    min_size = min(H, W, cut_size)

    # Deterministic stand-in for torch.rand / torch.randint (host side).
    rng = np.random.RandomState(seed)
    wy_np = np.zeros((cutn, S, H), np.float32)
    wxt_np = np.zeros((cutn, W, S_pad), np.float32)
    for n in range(cutn):
        size = int(rng.rand() ** cut_pow * (max_size - min_size) + min_size)
        offx = int(rng.randint(0, W - size + 1))
        offy = int(rng.randint(0, H - size + 1))
        wy_np[n] = _adaptive_pool_matrix(size, S, offy, H)
        wxt_np[n, :, :S] = _adaptive_pool_matrix(size, S, offx, W).T

    # bf16 operands, f32 accumulation on the MXU.
    wy = jnp.asarray(wy_np, dtype=jnp.bfloat16)        # (cutn, S, H)
    wxt = jnp.asarray(wxt_np, dtype=jnp.bfloat16)      # (cutn, W, S_pad)
    xf = x.reshape(P * H, W).astype(jnp.bfloat16)      # (P*H, W), pure reshape

    tp, n_pt = _choose_p_tile(P, H, W, S, S_pad)
    vmem_limit = int(min(max(2 * _step_vmem_bytes(tp, H, W, S, S_pad),
                             32 * 1024 * 1024), 64 * 1024 * 1024))

    flops = 2 * cutn * (P * H * W * S_pad + P * S * H * S_pad)
    bytes_accessed = (xf.size * 2 + wy.size * 2 + wxt.size * 2
                      + cutn * P * S * S_pad * 4)

    kernel = functools.partial(_cutout_kernel, tp=tp, h=H)

    out = pl.pallas_call(
        kernel,
        out_shape=jax.ShapeDtypeStruct((cutn, P, S, S_pad), x.dtype),
        grid=(n_pt, cutn),
        in_specs=[
            # image row-slab: depends only on the (outer) P-tile axis, so it is
            # not re-fetched across the inner cutout loop.
            pl.BlockSpec((tp * H, W), lambda p, n: (p, 0)),
            # per-cutout pooling matrices (leading cutout dim squeezed away)
            pl.BlockSpec((None, S, H), lambda p, n: (n, 0, 0)),
            pl.BlockSpec((None, W, S_pad), lambda p, n: (n, 0, 0)),
        ],
        out_specs=pl.BlockSpec((None, tp, S, S_pad), lambda p, n: (n, p, 0, 0)),
        compiler_params=pltpu.CompilerParams(
            dimension_semantics=("parallel", "parallel"),  # v7x megacore
            vmem_limit_bytes=vmem_limit),
        cost_estimate=pl.CostEstimate(
            flops=flops, transcendentals=0, bytes_accessed=bytes_accessed),
    )(xf, wy, wxt)

    out = out[..., :S]                                   # drop lane padding
    # torch.cat(cutouts) along dim 0 -> (cutn*B, C, cut_size, cut_size)
    out = out.reshape(cutn, B, C, S, S).reshape(cutn * B, C, S, S)
    return out, (wy, wxt)


def _reference(x, wy, wxt, cut_size):
    """Pure-JAX mirror of the kernel math (same bf16/f32 path, no Pallas)."""
    B, C, H, W = x.shape
    P = B * C
    S = cut_size
    xf = x.reshape(P * H, W).astype(wxt.dtype)
    outs = []
    for n in range(wy.shape[0]):
        t1 = jnp.dot(xf, wxt[n], preferred_element_type=jnp.float32)
        t1 = t1.astype(wy.dtype).reshape(P, H, -1)
        o = jnp.einsum('sh,phn->psn', wy[n], t1,
                       preferred_element_type=jnp.float32)
        outs.append(o[..., :S].astype(x.dtype))
    out = jnp.stack(outs)                                # (cutn, P, S, S)
    return out.reshape(wy.shape[0], B, C, S, S).reshape(-1, C, S, S)


if __name__ == "__main__":
    B, C, H, W = 2, 4, 16, 16
    cut_size, cutn, cut_pow = 8, 4, 1.0

    key = jax.random.PRNGKey(0)
    x = jax.random.normal(key, (B, C, H, W), dtype=jnp.float32)

    out, (wy, wxt) = make_cutouts(x, cut_size, cutn, cut_pow, seed=0)
    out = jax.block_until_ready(out)

    ref = _reference(x, wy, wxt, cut_size)
    assert out.shape == (cutn * B, C, cut_size, cut_size), out.shape
    np.testing.assert_allclose(np.asarray(out), np.asarray(ref),
                               rtol=1e-2, atol=1e-2)
    print("KERNEL_OK")
</pallas_src>

<mosaic_0001>
module attributes {stable_mosaic.version = 11 : i64} {
  func.func @_cutout_kernel(%arg0: i32, %arg1: i32, %arg2: memref<128x16xbf16, #tpu.memory_space<vmem>>, %arg3: memref<1x8x16xbf16, #tpu.memory_space<vmem>>, %arg4: memref<1x16x128xbf16, #tpu.memory_space<vmem>>, %arg5: memref<1x8x8x128xf32, #tpu.memory_space<vmem>>) attributes {dimension_semantics = [#tpu.dimension_semantics<parallel>, #tpu.dimension_semantics<parallel>], iteration_bounds = array<i64: 1, 4>, scalar_prefetch = 0 : i64, scratch_operands = 0 : i64, tpu.core_type = #tpu.core_type<tc>, window_params = [{transform_indices = @transform_0, window_bounds = array<i64: 128, 16>}, {transform_indices = @transform_1, window_bounds = array<i64: 1, 8, 16>}, {transform_indices = @transform_2, window_bounds = array<i64: 1, 16, 128>}, {transform_indices = @transform_3, window_bounds = array<i64: 1, 8, 8, 128>}]} {
    %c0 = arith.constant 0 : index
    %c0_0 = arith.constant 0 : index
    %0 = vector.load %arg2[%c0, %c0_0] : memref<128x16xbf16, #tpu.memory_space<vmem>>, vector<128x16xbf16>
    %c0_1 = arith.constant 0 : index
    %c0_2 = arith.constant 0 : index
    %c0_3 = arith.constant 0 : index
    %1 = vector.load %arg4[%c0_1, %c0_2, %c0_3] : memref<1x16x128xbf16, #tpu.memory_space<vmem>>, vector<1x16x128xbf16>
    %2 = vector.shape_cast %1 : vector<1x16x128xbf16> to vector<16x128xbf16>
    %cst = arith.constant dense<0.000000e+00> : vector<128x128xf32>
    %3 = tpu.matmul %0, %2, %cst {dimension_numbers = #tpu.dot_dimension_numbers<[1], [0], [0], [1], [0, 0, 1, 1], [], []>} : vector<128x16xbf16>, vector<16x128xbf16>, vector<128x128xf32> -> vector<128x128xf32>
    %4 = arith.truncf %3 : vector<128x128xf32> to vector<128x128xbf16>
    %c0_4 = arith.constant 0 : index
    %c0_5 = arith.constant 0 : index
    %c0_6 = arith.constant 0 : index
    %5 = vector.load %arg3[%c0_4, %c0_5, %c0_6] : memref<1x8x16xbf16, #tpu.memory_space<vmem>>, vector<1x8x16xbf16>
    %6 = vector.shape_cast %5 : vector<1x8x16xbf16> to vector<8x16xbf16>
    %7 = vector.extract_strided_slice %4 {offsets = [0, 0], sizes = [16, 128], strides = [1, 1]} : vector<128x128xbf16> to vector<16x128xbf16>
    %cst_7 = arith.constant dense<0.000000e+00> : vector<8x128xf32>
    %8 = tpu.matmul %6, %7, %cst_7 {dimension_numbers = #tpu.dot_dimension_numbers<[1], [0], [0], [1], [0, 0, 1, 1], [], []>} : vector<8x16xbf16>, vector<16x128xbf16>, vector<8x128xf32> -> vector<8x128xf32>
    %c0_8 = arith.constant 0 : index
    %c0_9 = arith.constant 0 : index
    %c0_10 = arith.constant 0 : index
    %c0_11 = arith.constant 0 : index
    %9 = vector.load %arg5[%c0_8, %c0_9, %c0_10, %c0_11] : memref<1x8x8x128xf32, #tpu.memory_space<vmem>>, vector<1x1x8x128xf32>
    %10 = vector.shape_cast %9 : vector<1x1x8x128xf32> to vector<8x128xf32>
    %11 = vector.shape_cast %8 : vector<8x128xf32> to vector<1x1x8x128xf32>
    tpu.vector_store %arg5[%c0_8, %c0_9, %c0_10, %c0_11], %11 {strides = array<i32>} : memref<1x8x8x128xf32, #tpu.memory_space<vmem>>, vector<1x1x8x128xf32>,
    %12 = vector.extract_strided_slice %4 {offsets = [16, 0], sizes = [16, 128], strides = [1, 1]} : vector<128x128xbf16> to vector<16x128xbf16>
    %cst_12 = arith.constant dense<0.000000e+00> : vector<8x128xf32>
    %13 = tpu.matmul %6, %12, %cst_12 {dimension_numbers = #tpu.dot_dimension_numbers<[1], [0], [0], [1], [0, 0, 1, 1], [], []>} : vector<8x16xbf16>, vector<16x128xbf16>, vector<8x128xf32> -> vector<8x128xf32>
    %c0_13 = arith.constant 0 : index
    %c1 = arith.constant 1 : index
    %c0_14 = arith.constant 0 : index
    %c0_15 = arith.constant 0 : index
    %14 = vector.load %arg5[%c0_13, %c1, %c0_14, %c0_15] : memref<1x8x8x128xf32, #tpu.memory_space<vmem>>, vector<1x1x8x128xf32>
    %15 = vector.shape_cast %14 : vector<1x1x8x128xf32> to vector<8x128xf32>
    %16 = vector.shape_cast %13 : vector<8x128xf32> to vector<1x1x8x128xf32>
    tpu.vector_store %arg5[%c0_13, %c1, %c0_14, %c0_15], %16 {strides = array<i32>} : memref<1x8x8x128xf32, #tpu.memory_space<vmem>>, vector<1x1x8x128xf32>,
    %17 = vector.extract_strided_slice %4 {offsets = [32, 0], sizes = [16, 128], strides = [1, 1]} : vector<128x128xbf16> to vector<16x128xbf16>
    %cst_16 = arith.constant dense<0.000000e+00> : vector<8x128xf32>
    %18 = tpu.matmul %6, %17, %cst_16 {dimension_numbers = #tpu.dot_dimension_numbers<[1], [0], [0], [1], [0, 0, 1, 1], [], []>} : vector<8x16xbf16>, vector<16x128xbf16>, vector<8x128xf32> -> vector<8x128xf32>
    %c0_17 = arith.constant 0 : index
    %c2 = arith.constant 2 : index
    %c0_18 = arith.constant 0 : index
    %c0_19 = arith.constant 0 : index
    %19 = vector.load %arg5[%c0_17, %c2, %c0_18, %c0_19] : memref<1x8x8x128xf32, #tpu.memory_space<vmem>>, vector<1x1x8x128xf32>
    %20 = vector.shape_cast %19 : vector<1x1x8x128xf32> to vector<8x128xf32>
    %21 = vector.shape_cast %18 : vector<8x128xf32> to vector<1x1x8x128xf32>
    tpu.vector_store %arg5[%c0_17, %c2, %c0_18, %c0_19], %21 {strides = array<i32>} : memref<1x8x8x128xf32, #tpu.memory_space<vmem>>, vector<1x1x8x128xf32>,
    %22 = vector.extract_strided_slice %4 {offsets = [48, 0], sizes = [16, 128], strides = [1, 1]} : vector<128x128xbf16> to vector<16x128xbf16>
    %cst_20 = arith.constant dense<0.000000e+00> : vector<8x128xf32>
    %23 = tpu.matmul %6, %22, %cst_20 {dimension_numbers = #tpu.dot_dimension_numbers<[1], [0], [0], [1], [0, 0, 1, 1], [], []>} : vector<8x16xbf16>, vector<16x128xbf16>, vector<8x128xf32> -> vector<8x128xf32>
    %c0_21 = arith.constant 0 : index
    %c3 = arith.constant 3 : index
    %c0_22 = arith.constant 0 : index
    %c0_23 = arith.constant 0 : index
    %24 = vector.load %arg5[%c0_21, %c3, %c0_22, %c0_23] : memref<1x8x8x128xf32, #tpu.memory_space<vmem>>, vector<1x1x8x128xf32>
    %25 = vector.shape_cast %24 : vector<1x1x8x128xf32> to vector<8x128xf32>
    %26 = vector.shape_cast %23 : vector<8x128xf32> to vector<1x1x8x128xf32>
    tpu.vector_store %arg5[%c0_21, %c3, %c0_22, %c0_23], %26 {strides = array<i32>} : memref<1x8x8x128xf32, #tpu.memory_space<vmem>>, vector<1x1x8x128xf32>,
    %27 = vector.extract_strided_slice %4 {offsets = [64, 0], sizes = [16, 128], strides = [1, 1]} : vector<128x128xbf16> to vector<16x128xbf16>
    %cst_24 = arith.constant dense<0.000000e+00> : vector<8x128xf32>
    %28 = tpu.matmul %6, %27, %cst_24 {dimension_numbers = #tpu.dot_dimension_numbers<[1], [0], [0], [1], [0, 0, 1, 1], [], []>} : vector<8x16xbf16>, vector<16x128xbf16>, vector<8x128xf32> -> vector<8x128xf32>
    %c0_25 = arith.constant 0 : index
    %c4 = arith.constant 4 : index
    %c0_26 = arith.constant 0 : index
    %c0_27 = arith.constant 0 : index
    %29 = vector.load %arg5[%c0_25, %c4, %c0_26, %c0_27] : memref<1x8x8x128xf32, #tpu.memory_space<vmem>>, vector<1x1x8x128xf32>
    %30 = vector.shape_cast %29 : vector<1x1x8x128xf32> to vector<8x128xf32>
    %31 = vector.shape_cast %28 : vector<8x128xf32> to vector<1x1x8x128xf32>
    tpu.vector_store %arg5[%c0_25, %c4, %c0_26, %c0_27], %31 {strides = array<i32>} : memref<1x8x8x128xf32, #tpu.memory_space<vmem>>, vector<1x1x8x128xf32>,
    %32 = vector.extract_strided_slice %4 {offsets = [80, 0], sizes = [16, 128], strides = [1, 1]} : vector<128x128xbf16> to vector<16x128xbf16>
    %cst_28 = arith.constant dense<0.000000e+00> : vector<8x128xf32>
    %33 = tpu.matmul %6, %32, %cst_28 {dimension_numbers = #tpu.dot_dimension_numbers<[1], [0], [0], [1], [0, 0, 1, 1], [], []>} : vector<8x16xbf16>, vector<16x128xbf16>, vector<8x128xf32> -> vector<8x128xf32>
    %c0_29 = arith.constant 0 : index
    %c5 = arith.constant 5 : index
    %c0_30 = arith.constant 0 : index
    %c0_31 = arith.constant 0 : index
    %34 = vector.load %arg5[%c0_29, %c5, %c0_30, %c0_31] : memref<1x8x8x128xf32, #tpu.memory_space<vmem>>, vector<1x1x8x128xf32>
    %35 = vector.shape_cast %34 : vector<1x1x8x128xf32> to vector<8x128xf32>
    %36 = vector.shape_cast %33 : vector<8x128xf32> to vector<1x1x8x128xf32>
    tpu.vector_store %arg5[%c0_29, %c5, %c0_30, %c0_31], %36 {strides = array<i32>} : memref<1x8x8x128xf32, #tpu.memory_space<vmem>>, vector<1x1x8x128xf32>,
    %37 = vector.extract_strided_slice %4 {offsets = [96, 0], sizes = [16, 128], strides = [1, 1]} : vector<128x128xbf16> to vector<16x128xbf16>
    %cst_32 = arith.constant dense<0.000000e+00> : vector<8x128xf32>
    %38 = tpu.matmul %6, %37, %cst_32 {dimension_numbers = #tpu.dot_dimension_numbers<[1], [0], [0], [1], [0, 0, 1, 1], [], []>} : vector<8x16xbf16>, vector<16x128xbf16>, vector<8x128xf32> -> vector<8x128xf32>
    %c0_33 = arith.constant 0 : index
    %c6 = arith.constant 6 : index
    %c0_34 = arith.constant 0 : index
    %c0_35 = arith.constant 0 : index
    %39 = vector.load %arg5[%c0_33, %c6, %c0_34, %c0_35] : memref<1x8x8x128xf32, #tpu.memory_space<vmem>>, vector<1x1x8x128xf32>
    %40 = vector.shape_cast %39 : vector<1x1x8x128xf32> to vector<8x128xf32>
    %41 = vector.shape_cast %38 : vector<8x128xf32> to vector<1x1x8x128xf32>
    tpu.vector_store %arg5[%c0_33, %c6, %c0_34, %c0_35], %41 {strides = array<i32>} : memref<1x8x8x128xf32, #tpu.memory_space<vmem>>, vector<1x1x8x128xf32>,
    %42 = vector.extract_strided_slice %4 {offsets = [112, 0], sizes = [16, 128], strides = [1, 1]} : vector<128x128xbf16> to vector<16x128xbf16>
    %cst_36 = arith.constant dense<0.000000e+00> : vector<8x128xf32>
    %43 = tpu.matmul %6, %42, %cst_36 {dimension_numbers = #tpu.dot_dimension_numbers<[1], [0], [0], [1], [0, 0, 1, 1], [], []>} : vector<8x16xbf16>, vector<16x128xbf16>, vector<8x128xf32> -> vector<8x128xf32>
    %c0_37 = arith.constant 0 : index
    %c7 = arith.constant 7 : index
    %c0_38 = arith.constant 0 : index
    %c0_39 = arith.constant 0 : index
    %44 = vector.load %arg5[%c0_37, %c7, %c0_38, %c0_39] : memref<1x8x8x128xf32, #tpu.memory_space<vmem>>, vector<1x1x8x128xf32>
    %45 = vector.shape_cast %44 : vector<1x1x8x128xf32> to vector<8x128xf32>
    %46 = vector.shape_cast %43 : vector<8x128xf32> to vector<1x1x8x128xf32>
    tpu.vector_store %arg5[%c0_37, %c7, %c0_38, %c0_39], %46 {strides = array<i32>} : memref<1x8x8x128xf32, #tpu.memory_space<vmem>>, vector<1x1x8x128xf32>,
    return
  }
  func.func @transform_0(%arg0: i32, %arg1: i32) -> (i32, i32) {
    %c0_i32 = arith.constant 0 : i32
    %c0_i32_0 = arith.constant 0 : i32
    return %arg0, %c0_i32 : i32, i32
  }
  func.func @transform_1(%arg0: i32, %arg1: i32) -> (i32, i32, i32) {
    %c0_i32 = arith.constant 0 : i32
    %c0_i32_0 = arith.constant 0 : i32
    %c0_i32_1 = arith.constant 0 : i32
    return %arg1, %c0_i32, %c0_i32_0 : i32, i32, i32
  }
  func.func @transform_2(%arg0: i32, %arg1: i32) -> (i32, i32, i32) {
    %c0_i32 = arith.constant 0 : i32
    %c0_i32_0 = arith.constant 0 : i32
    %c0_i32_1 = arith.constant 0 : i32
    return %arg1, %c0_i32, %c0_i32_0 : i32, i32, i32
  }
  func.func @transform_3(%arg0: i32, %arg1: i32) -> (i32, i32, i32, i32) {
    %c0_i32 = arith.constant 0 : i32
    %c0_i32_0 = arith.constant 0 : i32
    %c0_i32_1 = arith.constant 0 : i32
    return %arg1, %arg0, %c0_i32, %c0_i32_0 : i32, i32, i32, i32
  }
}

</mosaic_0001>

<llo_original>
// kernel: tpu_custom_call.1
$region0: #{tpu_custom_call.1}
  #allocation0 [shape = 'u32[]', space=smem, size = 0x4, offset = 0x4, fixed_abs, tag = 'smem constant byte address 0x4 - core index']
  #allocation1 [shape = 'u32[144,128]{1,0:T(1,128)}', space=vmem, size = 0x12000, scoped, tag = 'internal scratch']
  %s0 = inlined_call_operand.vmem [shape: bf16[128,16], index: 0, kind: input, shape index: {}]
  %s1 = inlined_call_operand.vmem [shape: bf16[4,8,16], index: 1, kind: input, shape index: {}]
  %s2 = inlined_call_operand.vmem [shape: bf16[4,16,128], index: 2, kind: input, shape index: {}]
  %s3 = inlined_call_operand.hbm [shape: f32[4,8,8,128], index: 3, kind: output, shape index: {}]
  %s4 = sld [smem:[#allocation0]]
  $region45: #{tpu_custom_call.1} parent=0
    _
  %s6 = ssub.s32 1, %s4
  %s7 = scalar_select 0, %s6, %s4
  $region1: #{tpu_custom_call.1} parent=0
    #allocation2 [shape = 'u8[65536]{0}', space=vmem, size = 0x10000, scoped, tag = 'output window, operand 0']
    #allocation3 [shape = 's32[2]{0}', space=sflag, size = 0x8, scoped, tag = 'scoped memory for tpu_custom_call.1']
    %8 = vsyncpa [#allocation3], 0
    %s9 = scalar_lea.sflag [#allocation3], 1
    %10 = vsyncpa %s9, 0
    loop: start=0, step=1, limit=6
    $region2: #{tpu_custom_call.1} parent=1 // loop_pre_header
      _
    $region3: #{tpu_custom_call.1} parent=1 // loop_header
      %s12 = sphi 0, %s16
      %p13 = scmp.ge.s32.totalorder %s12, 6
      %s19 = sphi 0, %s31
      %s20 = sphi 0, %s27
      %s21 = sphi 0, %s19
      %s22 = sphi 0, %s20
      %s23 = sphi 0, %s21
      %s24 = sphi 0, %s22
      %s34 = sphi 0, %s36
      %s37 = sphi 0, %s34
      %s38 = sphi 0, %s37
      %s54 = sphi 0, %s38
      %s60 = sphi 0, %s62
      %s63 = sphi 0, %s60
      %s64 = sphi 0, %s63
      %s80 = sphi 0, %s64
      %s86 = sphi 0, %s88
      %s89 = sphi 0, %s86
      %s90 = sphi 0, %s89
      %s106 = sphi 0, %s90
      %s114 = sphi 0, %s116
      %s117 = sphi 0, %s114
      %s118 = sphi 0, %s117
      %s134 = sphi 0, %s118
    $region4: #{tpu_custom_call.1} parent=1 // loop_header_branch
      %15 = sbr.rel (%p13) target = $region8
    $region5: #{tpu_custom_call.1} parent=1 // loop_body
      %s17 = ssub.s32 %s12, 1
      %s18 = ssub.s32 %s12, 2
      %s25 = sadd.s32 1, %s20
      %p26 = scmp.ge.s32.totalorder %s25, 4
      %s27 = scalar_select %p26, 0, %s25
      %s28 = sadd.s32 1, %s19
      %s29 = scalar_select %p26, %s28, %s19
      %p30 = scmp.ge.s32.totalorder %s29, 1
      %s31 = scalar_select %p30, 0, %s29
      %s32 = ssub.s32 %s19, %s31
      %p33 = scmp.eq.s32.totalorder %s32, 0
      %s35 = sadd.s32 %s34, 1
      %s36 = scalar_select %p33, %s34, %s35
      %p39 = pneg %p33
      %p40 = scmp.eq.s32.totalorder %s12, 3
      %p41 = por %p39, %p40
      %p42 = scmp.ne.s32.totalorder %s34, %s37
      %p43 = scmp.eq.s32.totalorder %s12, 0
      %p44 = por %p42, %p43
      %p45 = scmp.ne.s32.totalorder %s34, %s37
      %p46 = scmp.eq.s32.totalorder %s17, 3
      %p47 = por %p45, %p46
      %p48 = scmp.ne.s32.totalorder %s37, %s38
      %p49 = scmp.eq.s32.totalorder %s17, 0
      %p50 = por %p48, %p49
      %p51 = scmp.ne.s32.totalorder %s37, %s38
      %p52 = scmp.eq.s32.totalorder %s18, 3
      %p53 = por %p51, %p52
      %p55 = scmp.ne.s32.totalorder %s38, %s54
      %p56 = scmp.eq.s32.totalorder %s18, 0
      %p57 = por %p55, %p56
      %s58 = ssub.s32 %s20, %s27
      %p59 = scmp.eq.s32.totalorder %s58, 0
      %s61 = sadd.s32 %s60, 1
      %s62 = scalar_select %p59, %s60, %s61
      %p65 = pneg %p59
      %p66 = scmp.eq.s32.totalorder %s12, 3
      %p67 = por %p65, %p66
      %p68 = scmp.ne.s32.totalorder %s60, %s63
      %p69 = scmp.eq.s32.totalorder %s12, 0
      %p70 = por %p68, %p69
      %p71 = scmp.ne.s32.totalorder %s60, %s63
      %p72 = scmp.eq.s32.totalorder %s17, 3
      %p73 = por %p71, %p72
      %p74 = scmp.ne.s32.totalorder %s63, %s64
      %p75 = scmp.eq.s32.totalorder %s17, 0
      %p76 = por %p74, %p75
      %p77 = scmp.ne.s32.totalorder %s63, %s64
      %p78 = scmp.eq.s32.totalorder %s18, 3
      %p79 = por %p77, %p78
      %p81 = scmp.ne.s32.totalorder %s64, %s80
      %p82 = scmp.eq.s32.totalorder %s18, 0
      %p83 = por %p81, %p82
      %s84 = ssub.s32 %s20, %s27
      %p85 = scmp.eq.s32.totalorder %s84, 0
      %s87 = sadd.s32 %s86, 1
      %s88 = scalar_select %p85, %s86, %s87
      %p91 = pneg %p85
      %p92 = scmp.eq.s32.totalorder %s12, 3
      %p93 = por %p91, %p92
      %p94 = scmp.ne.s32.totalorder %s86, %s89
      %p95 = scmp.eq.s32.totalorder %s12, 0
      %p96 = por %p94, %p95
      %p97 = scmp.ne.s32.totalorder %s86, %s89
      %p98 = scmp.eq.s32.totalorder %s17, 3
      %p99 = por %p97, %p98
      %p100 = scmp.ne.s32.totalorder %s89, %s90
      %p101 = scmp.eq.s32.totalorder %s17, 0
      %p102 = por %p100, %p101
      %p103 = scmp.ne.s32.totalorder %s89, %s90
      %p104 = scmp.eq.s32.totalorder %s18, 3
      %p105 = por %p103, %p104
      %p107 = scmp.ne.s32.totalorder %s90, %s106
      %p108 = scmp.eq.s32.totalorder %s18, 0
      %p109 = por %p107, %p108
      %s110 = ssub.s32 %s20, %s27
      %s111 = ssub.s32 %s19, %s31
      %s112 = sor.u32 %s110, %s111
      %p113 = scmp.eq.s32.totalorder %s112, 0
      %s115 = sadd.s32 %s114, 1
      %s116 = scalar_select %p113, %s114, %s115
      %p119 = pneg %p113
      %p120 = scmp.eq.s32.totalorder %s12, 3
      %p121 = por %p119, %p120
      %p122 = scmp.ne.s32.totalorder %s114, %s117
      %p123 = scmp.eq.s32.totalorder %s12, 0
      %p124 = por %p122, %p123
      %p125 = scmp.ne.s32.totalorder %s114, %s117
      %p126 = scmp.eq.s32.totalorder %s17, 3
      %p127 = por %p125, %p126
      %p128 = scmp.ne.s32.totalorder %s117, %s118
      %p129 = scmp.eq.s32.totalorder %s17, 0
      %p130 = por %p128, %p129
      %p131 = scmp.ne.s32.totalorder %s117, %s118
      %p132 = scmp.eq.s32.totalorder %s18, 3
      %p133 = por %p131, %p132
      %p135 = scmp.ne.s32.totalorder %s118, %s134
      %p136 = scmp.eq.s32.totalorder %s18, 0
      %p137 = por %p135, %p136
      %p138 = scmp.le.s32.totalorder 1, %s12
      %p139 = scmp.lt.s32.totalorder %s12, 5
      %p140 = pnand %p138, %p139
      %p141 = pneg %p140
      // Predicated region
      $region9: #{tpu_custom_call.1} parent=5 // pred_check
        _
      $region10: #{tpu_custom_call.1} parent=5 // pred_check_branch
        %143 = sbr.rel (%p140) target = $region12
      $region11: #{tpu_custom_call.1} parent=5 // pred_region
        %s144 = ssub.s32 %s12, 1
        // Predicated region
        $region13: #{tpu_custom_call.1} parent=11 // pred_check
          %p145 = pneg %p50
        $region14: #{tpu_custom_call.1} parent=11 // pred_check_branch
          %147 = sbr.rel (%p145) target = $region16
        $region15: #{tpu_custom_call.1} parent=11 // pred_region
          %s148 = smul.u32 16, %s21
          %p149 = scmp.lt.s32.totalorder %s148, 15
          %s150 = scalar_select %p149, %s148, 15
          %s151 = smul.addr %s150, 4
          %s152 = scalar_lea.vmem %s0, %s151
          %s153 = smul.u32 16, %s21
        $region16: #{tpu_custom_call.1} parent=11 // pred_fallthru
          _
      $region12: #{tpu_custom_call.1} parent=5 // pred_fallthru
        _
      %p154 = scmp.lt.s32.totalorder %s12, 4
      // Predicated region
      $region17: #{tpu_custom_call.1} parent=5 // pred_check
        %p155 = pneg %p154
      $region18: #{tpu_custom_call.1} parent=5 // pred_check_branch
        %157 = sbr.rel (%p155) target = $region20
      $region19: #{tpu_custom_call.1} parent=5 // pred_region
        // Predicated region
        $region21: #{tpu_custom_call.1} parent=19 // pred_check
          %p158 = pneg %p70
        $region22: #{tpu_custom_call.1} parent=19 // pred_check_branch
          %160 = sbr.rel (%p158) target = $region24
        $region23: #{tpu_custom_call.1} parent=19 // pred_region
          %p161 = scmp.lt.s32.totalorder %s20, 3
          %s162 = scalar_select %p161, %s20, 3
          %s163 = smul.addr %s162, 4
          %s164 = scalar_lea.vmem %s1, %s163
        $region24: #{tpu_custom_call.1} parent=19 // pred_fallthru
          _
        // Predicated region
        $region25: #{tpu_custom_call.1} parent=19 // pred_check
          %p165 = pneg %p96
        $region26: #{tpu_custom_call.1} parent=19 // pred_check_branch
          %167 = sbr.rel (%p165) target = $region28
        $region27: #{tpu_custom_call.1} parent=19 // pred_region
          %p168 = scmp.lt.s32.totalorder %s20, 3
          %s169 = scalar_select %p168, %s20, 3
          %s170 = smul.addr %s169, 2
          %s171 = smul.addr %s170, 4
          %s172 = scalar_lea.vmem %s2, %s171
        $region28: #{tpu_custom_call.1} parent=19 // pred_fallthru
          _
      $region20: #{tpu_custom_call.1} parent=5 // pred_fallthru
        _
      %p173 = scmp.le.s32.totalorder 1, %s12
      %p174 = scmp.lt.s32.totalorder %s12, 5
      %p175 = pnand %p173, %p174
      %p176 = pneg %p175
      // Predicated region
      $region29: #{tpu_custom_call.1} parent=5 // pred_check
        _
      $region30: #{tpu_custom_call.1} parent=5 // pred_check_branch
        %178 = sbr.rel (%p175) target = $region32
      $region31: #{tpu_custom_call.1} parent=5 // pred_region
        %s179 = ssub.s32 %s12, 1
        %s180 = smul.u32 16, %s21
        %p181 = scmp.lt.s32.totalorder %s180, 15
        %s182 = scalar_select %p181, %s180, 15
        %s183 = smul.addr %s182, 4
        %s184 = scalar_lea.vmem %s0, %s183
        %p185 = pneg %p50
        %p186 = pneg %p47
        %p187 = scmp.lt.s32.totalorder %s22, 3
        %s188 = scalar_select %p187, %s22, 3
        %s189 = smul.addr %s188, 4
        %s190 = scalar_lea.vmem %s1, %s189
        %p191 = pneg %p76
        %p192 = pneg %p73
        %p193 = scmp.lt.s32.totalorder %s22, 3
        %s194 = scalar_select %p193, %s22, 3
        %s195 = smul.addr %s194, 2
        %s196 = smul.addr %s195, 4
        %s197 = scalar_lea.vmem %s2, %s196
        %p198 = pneg %p102
        %p199 = pneg %p99
        %p200 = pneg %p130
        %p201 = pneg %p127
        %s202 = sand.u32 %s117, 1
        %s203 = scalar_lea.sflag [#allocation3], %s202
        %s204 = sand.u32 %s117, 1
        %s205 = smul.addr %s204, 64
        %s206 = scalar_lea.vmem [#allocation2], %s205
        %s207 = smul.u32 16, %s21
        %p208 = scmp.lt.s32.totalorder %s207, 15
        %s209 = scalar_select %p208, %s207, 15
        %s210 = smul.addr %s209, 4
        %s211 = scalar_lea.vmem %s0, %s210
        %s212 = smul.u32 16, %s21
        %p213 = scmp.lt.s32.totalorder %s22, 3
        %s214 = scalar_select %p213, %s22, 3
        %s215 = smul.addr %s214, 4
        %s216 = scalar_lea.vmem %s1, %s215
        %p217 = scmp.lt.s32.totalorder %s22, 3
        %s218 = scalar_select %p217, %s22, 3
        %s219 = smul.addr %s218, 2
        %s220 = smul.addr %s219, 4
        %s221 = scalar_lea.vmem %s2, %s220
        %s222 = smul.u32 8, %s21
        %v224 = vld [vmem:[%s211] sm:$0xf]
        %v225 = vld [vmem:[%s211 + $0x4] sm:$0xf]
        %v226 = vld [vmem:[%s211 + $0x8] sm:$0xf]
        %v227 = vld [vmem:[%s211 + $0xc] sm:$0xf]
        %v228 = vld [vmem:[%s211 + $0x10] sm:$0xf]
        %v229 = vld [vmem:[%s211 + $0x14] sm:$0xf]
        %v230 = vld [vmem:[%s211 + $0x18] sm:$0xf]
        %v231 = vld [vmem:[%s211 + $0x1c] sm:$0xf]
        %v232 = vld [vmem:[%s211 + $0x20] sm:$0xf]
        %v233 = vld [vmem:[%s211 + $0x24] sm:$0xf]
        %v234 = vld [vmem:[%s211 + $0x28] sm:$0xf]
        %v235 = vld [vmem:[%s211 + $0x2c] sm:$0xf]
        %v236 = vld [vmem:[%s211 + $0x30] sm:$0xf]
        %v237 = vld [vmem:[%s211 + $0x34] sm:$0xf]
        %v238 = vld [vmem:[%s211 + $0x38] sm:$0xf]
        %v239 = vld [vmem:[%s211 + $0x3c] sm:$0xf]
        %v240 = vld [vmem:[%s221] sm:$0xf]
        %v241 = vld [vmem:[%s221 + $0x4] sm:$0xf]
        %v258 = vunpack.c.l.b16 %v224
        %v259 = vunpack.c.l.b16 %v225
        %v260 = vunpack.c.l.b16 %v226
        %v261 = vunpack.c.l.b16 %v227
        %v262 = vunpack.c.l.b16 %v228
        %v263 = vunpack.c.l.b16 %v229
        %v264 = vunpack.c.l.b16 %v230
        %v265 = vunpack.c.l.b16 %v231
        %v266 = vunpack.c.l.b16 %v232
        %v267 = vunpack.c.l.b16 %v233
        %v268 = vunpack.c.l.b16 %v234
        %v269 = vunpack.c.l.b16 %v235
        %v270 = vunpack.c.l.b16 %v236
        %v271 = vunpack.c.l.b16 %v237
        %v272 = vunpack.c.l.b16 %v238
        %v273 = vunpack.c.l.b16 %v239
        %v274 = vpack.c.b16 %v259, %v258
        %v275 = vpack.c.b16 %v261, %v260
        %v276 = vpack.c.b16 %v263, %v262
        %v277 = vpack.c.b16 %v265, %v264
        %v278 = vpack.c.b16 %v267, %v266
        %v279 = vpack.c.b16 %v269, %v268
        %v280 = vpack.c.b16 %v271, %v270
        %v281 = vpack.c.b16 %v273, %v272
        %v284 = vunpack.c.l.b16 %v240
        %v285 = vunpack.c.l.b16 %v241
        %v286 = vpack.c.b16 %v285, %v284
        %vm288 = vcmask 130048
        %v290 = vsel %vm288, %v274, 0
        %v293 = vsel %vm288, %v275, 0
        %v296 = vsel %vm288, %v276, 0
        %v299 = vsel %vm288, %v277, 0
        %v302 = vsel %vm288, %v278, 0
        %v305 = vsel %vm288, %v279, 0
        %v308 = vsel %vm288, %v280, 0
        %v311 = vsel %vm288, %v281, 0
        %313 = vmatprep.subr.bf16.mxu0 0
        %314 = vmatpush1.bf16.msra.mxu0 0
        %315 = vmatprep.subr.bf16.mxu0 0
        %316 = vmatpush1.bf16.msra.mxu0 0
        %317 = vmatprep.subr.bf16.mxu0 0
        %318 = vmatpush1.bf16.msra.mxu0 0
        %319 = vmatprep.subr.bf16.mxu0 0
        %320 = vmatpush1.bf16.msra.mxu0 0
        %321 = vmatprep.subr.bf16.mxu0 0
        %322 = vmatpush1.bf16.msra.mxu0 0
        %323 = vmatprep.subr.bf16.mxu0 0
        %324 = vmatpush1.bf16.msra.mxu0 0
        %325 = vmatprep.subr.bf16.mxu0 0
        %326 = vmatpush1.bf16.msra.mxu0 0
        %327 = vmatprep.subr.bf16.mxu0 0
        %328 = vmatpush1.bf16.msra.mxu0 %v286
        %329 = vmatprep.subr.bf16.mxu0 0
        %330 = vmatpush2.bf16.msra.mxu0 0
        %331 = vmatprep.subr.bf16.mxu0 0
        %332 = vmatpush2.bf16.msra.mxu0 0
        %333 = vmatprep.subr.bf16.mxu0 0
        %334 = vmatpush2.bf16.msra.mxu0 0
        %335 = vmatprep.subr.bf16.mxu0 0
        %336 = vmatpush2.bf16.msra.mxu0 0
        %337 = vmatprep.subr.bf16.mxu0 0
        %338 = vmatpush2.bf16.msra.mxu0 0
        %339 = vmatprep.subr.bf16.mxu0 0
        %340 = vmatpush2.bf16.msra.mxu0 0
        %341 = vmatprep.subr.bf16.mxu0 0
        %342 = vmatpush2.bf16.msra.mxu0 0
        %343 = vmatprep.subr.bf16.mxu0 0
        %344 = vmatpush2.bf16.msra.mxu0 0
        %345 = vmatprep.mubr.bf16.mxu0 0
        %346 = vmatmul.mubr.bf16.gmra.mxu0 %v290
        %v347 = vpop.f32.mrf.mxu0
        %v348 = vadd.f32 0.0, %v347
        %v349 = vpop.f32.mrf.mxu0
        %v350 = vpop.f32.mrf.mxu0
        %v351 = vadd.f32 0.0, %v350
        %v352 = vpop.f32.mrf.mxu0
        %353 = vmatprep.mubr.bf16.mxu0 0
        %354 = vmatmul.mubr.bf16.gmra.mxu0 %v293
        %v355 = vpop.f32.mrf.mxu0
        %v356 = vadd.f32 0.0, %v355
        %v357 = vpop.f32.mrf.mxu0
        %v358 = vpop.f32.mrf.mxu0
        %v359 = vadd.f32 0.0, %v358
        %v360 = vpop.f32.mrf.mxu0
        %361 = vmatprep.mubr.bf16.mxu0 0
        %362 = vmatmul.mubr.bf16.gmra.mxu0 %v296
        %v363 = vpop.f32.mrf.mxu0
        %v364 = vadd.f32 0.0, %v363
        %v365 = vpop.f32.mrf.mxu0
        %v366 = vpop.f32.mrf.mxu0
        %v367 = vadd.f32 0.0, %v366
        %v368 = vpop.f32.mrf.mxu0
        %369 = vmatprep.mubr.bf16.mxu0 0
        %370 = vmatmul.mubr.bf16.gmra.mxu0 %v299
        %v371 = vpop.f32.mrf.mxu0
        %v372 = vadd.f32 0.0, %v371
        %v373 = vpop.f32.mrf.mxu0
        %v374 = vpop.f32.mrf.mxu0
        %v375 = vadd.f32 0.0, %v374
        %v376 = vpop.f32.mrf.mxu0
        %377 = vmatprep.mubr.bf16.mxu0 0
        %378 = vmatmul.mubr.bf16.gmra.mxu0 %v302
        %v379 = vpop.f32.mrf.mxu0
        %v380 = vadd.f32 0.0, %v379
        %v381 = vpop.f32.mrf.mxu0
        %v382 = vpop.f32.mrf.mxu0
        %v383 = vadd.f32 0.0, %v382
        %v384 = vpop.f32.mrf.mxu0
        %385 = vmatprep.mubr.bf16.mxu0 0
        %386 = vmatmul.mubr.bf16.gmra.mxu0 %v305
        %v387 = vpop.f32.mrf.mxu0
        %v388 = vadd.f32 0.0, %v387
        %v389 = vpop.f32.mrf.mxu0
        %v390 = vpop.f32.mrf.mxu0
        %v391 = vadd.f32 0.0, %v390
        %v392 = vpop.f32.mrf.mxu0
        %393 = vmatprep.mubr.bf16.mxu0 0
        %394 = vmatmul.mubr.bf16.gmra.mxu0 %v308
        %v395 = vpop.f32.mrf.mxu0
        %v396 = vadd.f32 0.0, %v395
        %v397 = vpop.f32.mrf.mxu0
        %v398 = vpop.f32.mrf.mxu0
        %v399 = vadd.f32 0.0, %v398
        %v400 = vpop.f32.mrf.mxu0
        %401 = vmatprep.mubr.bf16.mxu0 0
        %402 = vmatmul.mubr.bf16.gmra.mxu0 %v311
        %v403 = vpop.f32.mrf.mxu0
        %v404 = vadd.f32 0.0, %v403
        %v405 = vpop.f32.mrf.mxu0
        %v406 = vpop.f32.mrf.mxu0
        %v407 = vadd.f32 0.0, %v406
        %v408 = vpop.f32.mrf.mxu0
        %409 = vdwg.mxu0
        %v410 = vpack.c.bf16 %v351, %v348
        %v411 = vpack.c.bf16 %v359, %v356
        %v412 = vpack.c.bf16 %v367, %v364
        %v413 = vpack.c.bf16 %v375, %v372
        %v414 = vpack.c.bf16 %v383, %v380
        %v415 = vpack.c.bf16 %v391, %v388
        %v416 = vpack.c.bf16 %v399, %v396
        %v417 = vpack.c.bf16 %v407, %v404
        %v418 = vld [vmem:[%s216] sm:$0xf]
        %v420 = vsel %vm288, %v418, 0
        %422 = vmatprep.subr.bf16.mxu0 0
        %423 = vmatpush1.bf16.msra.mxu0 0
        %424 = vmatprep.subr.bf16.mxu0 0
        %425 = vmatpush1.bf16.msra.mxu0 0
        %426 = vmatprep.subr.bf16.mxu0 0
        %427 = vmatpush1.bf16.msra.mxu0 0
        %428 = vmatprep.subr.bf16.mxu0 0
        %429 = vmatpush1.bf16.msra.mxu0 0
        %430 = vmatprep.subr.bf16.mxu0 0
        %431 = vmatpush1.bf16.msra.mxu0 0
        %432 = vmatprep.subr.bf16.mxu0 0
        %433 = vmatpush1.bf16.msra.mxu0 0
        %434 = vmatprep.subr.bf16.mxu0 0
        %435 = vmatpush1.bf16.msra.mxu0 0
        %436 = vmatprep.subr.bf16.mxu0 0
        %437 = vmatpush1.bf16.msra.mxu0 %v410
        %438 = vmatprep.subr.bf16.mxu0 0
        %439 = vmatpush2.bf16.msra.mxu0 0
        %440 = vmatprep.subr.bf16.mxu0 0
        %441 = vmatpush2.bf16.msra.mxu0 0
        %442 = vmatprep.subr.bf16.mxu0 0
        %443 = vmatpush2.bf16.msra.mxu0 0
        %444 = vmatprep.subr.bf16.mxu0 0
        %445 = vmatpush2.bf16.msra.mxu0 0
        %446 = vmatprep.subr.bf16.mxu0 0
        %447 = vmatpush2.bf16.msra.mxu0 0
        %448 = vmatprep.subr.bf16.mxu0 0
        %449 = vmatpush2.bf16.msra.mxu0 0
        %450 = vmatprep.subr.bf16.mxu0 0
        %451 = vmatpush2.bf16.msra.mxu0 0
        %452 = vmatprep.subr.bf16.mxu0 0
        %453 = vmatpush2.bf16.msra.mxu0 0
        %454 = vmatprep.mubr.bf16.mxu0 0
        %455 = vmatmul.mubr.bf16.gmra.mxu0 %v420
        %v456 = vpop.f32.mrf.mxu0
        %v457 = vadd.f32 0.0, %v456
        %v458 = vpop.f32.mrf.mxu0
        %v459 = vpop.f32.mrf.mxu0
        %v460 = vpop.f32.mrf.mxu0
        %461 = vdwg.mxu0
        %462 = vst [vmem:[%s206] sm:$0xff] %v457
        %463 = vmatprep.subr.bf16.mxu0 0
        %464 = vmatpush1.bf16.msra.mxu0 0
        %465 = vmatprep.subr.bf16.mxu0 0
        %466 = vmatpush1.bf16.msra.mxu0 0
        %467 = vmatprep.subr.bf16.mxu0 0
        %468 = vmatpush1.bf16.msra.mxu0 0
        %469 = vmatprep.subr.bf16.mxu0 0
        %470 = vmatpush1.bf16.msra.mxu0 0
        %471 = vmatprep.subr.bf16.mxu0 0
        %472 = vmatpush1.bf16.msra.mxu0 0
        %473 = vmatprep.subr.bf16.mxu0 0
        %474 = vmatpush1.bf16.msra.mxu0 0
        %475 = vmatprep.subr.bf16.mxu0 0
        %476 = vmatpush1.bf16.msra.mxu0 0
        %477 = vmatprep.subr.bf16.mxu0 0
        %478 = vmatpush1.bf16.msra.mxu0 %v411
        %479 = vmatprep.subr.bf16.mxu0 0
        %480 = vmatpush2.bf16.msra.mxu0 0
        %481 = vmatprep.subr.bf16.mxu0 0
        %482 = vmatpush2.bf16.msra.mxu0 0
        %483 = vmatprep.subr.bf16.mxu0 0
        %484 = vmatpush2.bf16.msra.mxu0 0
        %485 = vmatprep.subr.bf16.mxu0 0
        %486 = vmatpush2.bf16.msra.mxu0 0
        %487 = vmatprep.subr.bf16.mxu0 0
        %488 = vmatpush2.bf16.msra.mxu0 0
        %489 = vmatprep.subr.bf16.mxu0 0
        %490 = vmatpush2.bf16.msra.mxu0 0
        %491 = vmatprep.subr.bf16.mxu0 0
        %492 = vmatpush2.bf16.msra.mxu0 0
        %493 = vmatprep.subr.bf16.mxu0 0
        %494 = vmatpush2.bf16.msra.mxu0 0
        %495 = vmatprep.mubr.bf16.mxu0 0
        %496 = vmatmul.mubr.bf16.gmra.mxu0 %v420
        %v497 = vpop.f32.mrf.mxu0
        %v498 = vadd.f32 0.0, %v497
        %v499 = vpop.f32.mrf.mxu0
        %v500 = vpop.f32.mrf.mxu0
        %v501 = vpop.f32.mrf.mxu0
        %502 = vdwg.mxu0
        %s503 = scalar_lea.vmem %s206, 8 [#allocation2]
        %504 = vst [vmem:[%s503] sm:$0xff] %v498
        %505 = vmatprep.subr.bf16.mxu0 0
        %506 = vmatpush1.bf16.msra.mxu0 0
        %507 = vmatprep.subr.bf16.mxu0 0
        %508 = vmatpush1.bf16.msra.mxu0 0
        %509 = vmatprep.subr.bf16.mxu0 0
        %510 = vmatpush1.bf16.msra.mxu0 0
        %511 = vmatprep.subr.bf16.mxu0 0
        %512 = vmatpush1.bf16.msra.mxu0 0
        %513 = vmatprep.subr.bf16.mxu0 0
        %514 = vmatpush1.bf16.msra.mxu0 0
        %515 = vmatprep.subr.bf16.mxu0 0
        %516 = vmatpush1.bf16.msra.mxu0 0
        %517 = vmatprep.subr.bf16.mxu0 0
        %518 = vmatpush1.bf16.msra.mxu0 0
        %519 = vmatprep.subr.bf16.mxu0 0
        %520 = vmatpush1.bf16.msra.mxu0 %v412
        %521 = vmatprep.subr.bf16.mxu0 0
        %522 = vmatpush2.bf16.msra.mxu0 0
        %523 = vmatprep.subr.bf16.mxu0 0
        %524 = vmatpush2.bf16.msra.mxu0 0
        %525 = vmatprep.subr.bf16.mxu0 0
        %526 = vmatpush2.bf16.msra.mxu0 0
        %527 = vmatprep.subr.bf16.mxu0 0
        %528 = vmatpush2.bf16.msra.mxu0 0
        %529 = vmatprep.subr.bf16.mxu0 0
        %530 = vmatpush2.bf16.msra.mxu0 0
        %531 = vmatprep.subr.bf16.mxu0 0
        %532 = vmatpush2.bf16.msra.mxu0 0
        %533 = vmatprep.subr.bf16.mxu0 0
        %534 = vmatpush2.bf16.msra.mxu0 0
        %535 = vmatprep.subr.bf16.mxu0 0
        %536 = vmatpush2.bf16.msra.mxu0 0
        %537 = vmatprep.mubr.bf16.mxu0 0
        %538 = vmatmul.mubr.bf16.gmra.mxu0 %v420
        %v539 = vpop.f32.mrf.mxu0
        %v540 = vadd.f32 0.0, %v539
        %v541 = vpop.f32.mrf.mxu0
        %v542 = vpop.f32.mrf.mxu0
        %v543 = vpop.f32.mrf.mxu0
        %544 = vdwg.mxu0
        %s545 = scalar_lea.vmem %s206, 16 [#allocation2]
        %546 = vst [vmem:[%s545] sm:$0xff] %v540
        %547 = vmatprep.subr.bf16.mxu0 0
        %548 = vmatpush1.bf16.msra.mxu0 0
        %549 = vmatprep.subr.bf16.mxu0 0
        %550 = vmatpush1.bf16.msra.mxu0 0
        %551 = vmatprep.subr.bf16.mxu0 0
        %552 = vmatpush1.bf16.msra.mxu0 0
        %553 = vmatprep.subr.bf16.mxu0 0
        %554 = vmatpush1.bf16.msra.mxu0 0
        %555 = vmatprep.subr.bf16.mxu0 0
        %556 = vmatpush1.bf16.msra.mxu0 0
        %557 = vmatprep.subr.bf16.mxu0 0
        %558 = vmatpush1.bf16.msra.mxu0 0
        %559 = vmatprep.subr.bf16.mxu0 0
        %560 = vmatpush1.bf16.msra.mxu0 0
        %561 = vmatprep.subr.bf16.mxu0 0
        %562 = vmatpush1.bf16.msra.mxu0 %v413
        %563 = vmatprep.subr.bf16.mxu0 0
        %564 = vmatpush2.bf16.msra.mxu0 0
        %565 = vmatprep.subr.bf16.mxu0 0
        %566 = vmatpush2.bf16.msra.mxu0 0
        %567 = vmatprep.subr.bf16.mxu0 0
        %568 = vmatpush2.bf16.msra.mxu0 0
        %569 = vmatprep.subr.bf16.mxu0 0
        %570 = vmatpush2.bf16.msra.mxu0 0
        %571 = vmatprep.subr.bf16.mxu0 0
        %572 = vmatpush2.bf16.msra.mxu0 0
        %573 = vmatprep.subr.bf16.mxu0 0
        %574 = vmatpush2.bf16.msra.mxu0 0
        %575 = vmatprep.subr.bf16.mxu0 0
        %576 = vmatpush2.bf16.msra.mxu0 0
        %577 = vmatprep.subr.bf16.mxu0 0
        %578 = vmatpush2.bf16.msra.mxu0 0
        %579 = vmatprep.mubr.bf16.mxu0 0
        %580 = vmatmul.mubr.bf16.gmra.mxu0 %v420
        %v581 = vpop.f32.mrf.mxu0
        %v582 = vadd.f32 0.0, %v581
        %v583 = vpop.f32.mrf.mxu0
        %v584 = vpop.f32.mrf.mxu0
        %v585 = vpop.f32.mrf.mxu0
        %586 = vdwg.mxu0
        %s587 = scalar_lea.vmem %s206, 24 [#allocation2]
        %588 = vst [vmem:[%s587] sm:$0xff] %v582
        %589 = vmatprep.subr.bf16.mxu0 0
        %590 = vmatpush1.bf16.msra.mxu0 0
        %591 = vmatprep.subr.bf16.mxu0 0
        %592 = vmatpush1.bf16.msra.mxu0 0
        %593 = vmatprep.subr.bf16.mxu0 0
        %594 = vmatpush1.bf16.msra.mxu0 0
        %595 = vmatprep.subr.bf16.mxu0 0
        %596 = vmatpush1.bf16.msra.mxu0 0
        %597 = vmatprep.subr.bf16.mxu0 0
        %598 = vmatpush1.bf16.msra.mxu0 0
        %599 = vmatprep.subr.bf16.mxu0 0
        %600 = vmatpush1.bf16.msra.mxu0 0
        %601 = vmatprep.subr.bf16.mxu0 0
        %602 = vmatpush1.bf16.msra.mxu0 0
        %603 = vmatprep.subr.bf16.mxu0 0
        %604 = vmatpush1.bf16.msra.mxu0 %v414
        %605 = vmatprep.subr.bf16.mxu0 0
        %606 = vmatpush2.bf16.msra.mxu0 0
        %607 = vmatprep.subr.bf16.mxu0 0
        %608 = vmatpush2.bf16.msra.mxu0 0
        %609 = vmatprep.subr.bf16.mxu0 0
        %610 = vmatpush2.bf16.msra.mxu0 0
        %611 = vmatprep.subr.bf16.mxu0 0
        %612 = vmatpush2.bf16.msra.mxu0 0
        %613 = vmatprep.subr.bf16.mxu0 0
        %614 = vmatpush2.bf16.msra.mxu0 0
        %615 = vmatprep.subr.bf16.mxu0 0
        %616 = vmatpush2.bf16.msra.mxu0 0
        %617 = vmatprep.subr.bf16.mxu0 0
        %618 = vmatpush2.bf16.msra.mxu0 0
        %619 = vmatprep.subr.bf16.mxu0 0
        %620 = vmatpush2.bf16.msra.mxu0 0
        %621 = vmatprep.mubr.bf16.mxu0 0
        %622 = vmatmul.mubr.bf16.gmra.mxu0 %v420
        %v623 = vpop.f32.mrf.mxu0
        %v624 = vadd.f32 0.0, %v623
        %v625 = vpop.f32.mrf.mxu0
        %v626 = vpop.f32.mrf.mxu0
        %v627 = vpop.f32.mrf.mxu0
        %628 = vdwg.mxu0
        %s629 = scalar_lea.vmem %s206, 32 [#allocation2]
        %630 = vst [vmem:[%s629] sm:$0xff] %v624
        %631 = vmatprep.subr.bf16.mxu0 0
        %632 = vmatpush1.bf16.msra.mxu0 0
        %633 = vmatprep.subr.bf16.mxu0 0
        %634 = vmatpush1.bf16.msra.mxu0 0
        %635 = vmatprep.subr.bf16.mxu0 0
        %636 = vmatpush1.bf16.msra.mxu0 0
        %637 = vmatprep.subr.bf16.mxu0 0
        %638 = vmatpush1.bf16.msra.mxu0 0
        %639 = vmatprep.subr.bf16.mxu0 0
        %640 = vmatpush1.bf16.msra.mxu0 0
        %641 = vmatprep.subr.bf16.mxu0 0
        %642 = vmatpush1.bf16.msra.mxu0 0
        %643 = vmatprep.subr.bf16.mxu0 0
        %644 = vmatpush1.bf16.msra.mxu0 0
        %645 = vmatprep.subr.bf16.mxu0 0
        %646 = vmatpush1.bf16.msra.mxu0 %v415
        %647 = vmatprep.subr.bf16.mxu0 0
        %648 = vmatpush2.bf16.msra.mxu0 0
        %649 = vmatprep.subr.bf16.mxu0 0
        %650 = vmatpush2.bf16.msra.mxu0 0
        %651 = vmatprep.subr.bf16.mxu0 0
        %652 = vmatpush2.bf16.msra.mxu0 0
        %653 = vmatprep.subr.bf16.mxu0 0
        %654 = vmatpush2.bf16.msra.mxu0 0
        %655 = vmatprep.subr.bf16.mxu0 0
        %656 = vmatpush2.bf16.msra.mxu0 0
        %657 = vmatprep.subr.bf16.mxu0 0
        %658 = vmatpush2.bf16.msra.mxu0 0
        %659 = vmatprep.subr.bf16.mxu0 0
        %660 = vmatpush2.bf16.msra.mxu0 0
        %661 = vmatprep.subr.bf16.mxu0 0
        %662 = vmatpush2.bf16.msra.mxu0 0
        %663 = vmatprep.mubr.bf16.mxu0 0
        %664 = vmatmul.mubr.bf16.gmra.mxu0 %v420
        %v665 = vpop.f32.mrf.mxu0
        %v666 = vadd.f32 0.0, %v665
        %v667 = vpop.f32.mrf.mxu0
        %v668 = vpop.f32.mrf.mxu0
        %v669 = vpop.f32.mrf.mxu0
        %670 = vdwg.mxu0
        %s671 = scalar_lea.vmem %s206, 40 [#allocation2]
        %672 = vst [vmem:[%s671] sm:$0xff] %v666
        %673 = vmatprep.subr.bf16.mxu0 0
        %674 = vmatpush1.bf16.msra.mxu0 0
        %675 = vmatprep.subr.bf16.mxu0 0
        %676 = vmatpush1.bf16.msra.mxu0 0
        %677 = vmatprep.subr.bf16.mxu0 0
        %678 = vmatpush1.bf16.msra.mxu0 0
        %679 = vmatprep.subr.bf16.mxu0 0
        %680 = vmatpush1.bf16.msra.mxu0 0
        %681 = vmatprep.subr.bf16.mxu0 0
        %682 = vmatpush1.bf16.msra.mxu0 0
        %683 = vmatprep.subr.bf16.mxu0 0
        %684 = vmatpush1.bf16.msra.mxu0 0
        %685 = vmatprep.subr.bf16.mxu0 0
        %686 = vmatpush1.bf16.msra.mxu0 0
        %687 = vmatprep.subr.bf16.mxu0 0
        %688 = vmatpush1.bf16.msra.mxu0 %v416
        %689 = vmatprep.subr.bf16.mxu0 0
        %690 = vmatpush2.bf16.msra.mxu0 0
        %691 = vmatprep.subr.bf16.mxu0 0
        %692 = vmatpush2.bf16.msra.mxu0 0
        %693 = vmatprep.subr.bf16.mxu0 0
        %694 = vmatpush2.bf16.msra.mxu0 0
        %695 = vmatprep.subr.bf16.mxu0 0
        %696 = vmatpush2.bf16.msra.mxu0 0
        %697 = vmatprep.subr.bf16.mxu0 0
        %698 = vmatpush2.bf16.msra.mxu0 0
        %699 = vmatprep.subr.bf16.mxu0 0
        %700 = vmatpush2.bf16.msra.mxu0 0
        %701 = vmatprep.subr.bf16.mxu0 0
        %702 = vmatpush2.bf16.msra.mxu0 0
        %703 = vmatprep.subr.bf16.mxu0 0
        %704 = vmatpush2.bf16.msra.mxu0 0
        %705 = vmatprep.mubr.bf16.mxu0 0
        %706 = vmatmul.mubr.bf16.gmra.mxu0 %v420
        %v707 = vpop.f32.mrf.mxu0
        %v708 = vadd.f32 0.0, %v707
        %v709 = vpop.f32.mrf.mxu0
        %v710 = vpop.f32.mrf.mxu0
        %v711 = vpop.f32.mrf.mxu0
        %712 = vdwg.mxu0
        %s713 = scalar_lea.vmem %s206, 48 [#allocation2]
        %714 = vst [vmem:[%s713] sm:$0xff] %v708
        %715 = vmatprep.subr.bf16.mxu0 0
        %716 = vmatpush1.bf16.msra.mxu0 0
        %717 = vmatprep.subr.bf16.mxu0 0
        %718 = vmatpush1.bf16.msra.mxu0 0
        %719 = vmatprep.subr.bf16.mxu0 0
        %720 = vmatpush1.bf16.msra.mxu0 0
        %721 = vmatprep.subr.bf16.mxu0 0
        %722 = vmatpush1.bf16.msra.mxu0 0
        %723 = vmatprep.subr.bf16.mxu0 0
        %724 = vmatpush1.bf16.msra.mxu0 0
        %725 = vmatprep.subr.bf16.mxu0 0
        %726 = vmatpush1.bf16.msra.mxu0 0
        %727 = vmatprep.subr.bf16.mxu0 0
        %728 = vmatpush1.bf16.msra.mxu0 0
        %729 = vmatprep.subr.bf16.mxu0 0
        %730 = vmatpush1.bf16.msra.mxu0 %v417
        %731 = vmatprep.subr.bf16.mxu0 0
        %732 = vmatpush2.bf16.msra.mxu0 0
        %733 = vmatprep.subr.bf16.mxu0 0
        %734 = vmatpush2.bf16.msra.mxu0 0
        %735 = vmatprep.subr.bf16.mxu0 0
        %736 = vmatpush2.bf16.msra.mxu0 0
        %737 = vmatprep.subr.bf16.mxu0 0
        %738 = vmatpush2.bf16.msra.mxu0 0
        %739 = vmatprep.subr.bf16.mxu0 0
        %740 = vmatpush2.bf16.msra.mxu0 0
        %741 = vmatprep.subr.bf16.mxu0 0
        %742 = vmatpush2.bf16.msra.mxu0 0
        %743 = vmatprep.subr.bf16.mxu0 0
        %744 = vmatpush2.bf16.msra.mxu0 0
        %745 = vmatprep.subr.bf16.mxu0 0
        %746 = vmatpush2.bf16.msra.mxu0 0
        %747 = vmatprep.mubr.bf16.mxu0 0
        %748 = vmatmul.mubr.bf16.gmra.mxu0 %v420
        %v749 = vpop.f32.mrf.mxu0
        %v750 = vadd.f32 0.0, %v749
        %v751 = vpop.f32.mrf.mxu0
        %v752 = vpop.f32.mrf.mxu0
        %v753 = vpop.f32.mrf.mxu0
        %754 = vdwg.mxu0
        %s755 = scalar_lea.vmem %s206, 56 [#allocation2]
        %756 = vst [vmem:[%s755] sm:$0xff] %v750
        %s757 = sand.u32 %s117, 1
        %s758 = scalar_lea.sflag [#allocation3], %s757
        %s759 = sand.u32 %s117, 1
        %s760 = smul.addr %s759, 64
        %s761 = scalar_lea.vmem [#allocation2], %s760
        // Predicated region
        $region33: #{tpu_custom_call.1} parent=31 // pred_check
          %p762 = pneg %p127
        $region34: #{tpu_custom_call.1} parent=31 // pred_check_branch
          %764 = sbr.rel (%p762) target = $region36
        $region35: #{tpu_custom_call.1} parent=31 // pred_region
          %s765 = smul.u32 8, %s21
          %s767 = ssub.s32 1024, 1024
          %768 = vsyncadd %s758, %s767
          %s769 = smul.addr %s22, 8
          %s770 = sadd.s32 %s765, %s769
          %s771 = smul.addr %s770, 128
          %s772 = scalar_lea.hbm %s3, %s771
          %s773 = sshll.u32 %s761, 4
          %s774 = int_to_ptr.vmem [resolvable:$true] %s773
          %779 = dma.vmem_to_hbm [thread:$0]  %s774, 1024, %s772, %s758, 128, 128, 8
        $region36: #{tpu_custom_call.1} parent=31 // pred_fallthru
          _
      $region32: #{tpu_custom_call.1} parent=5 // pred_fallthru
        _
      %p780 = scmp.le.s32.totalorder 2, %s12
      // Predicated region
      $region37: #{tpu_custom_call.1} parent=5 // pred_check
        %p781 = pneg %p780
      $region38: #{tpu_custom_call.1} parent=5 // pred_check_branch
        %783 = sbr.rel (%p781) target = $region40
      $region39: #{tpu_custom_call.1} parent=5 // pred_region
        %s784 = ssub.s32 %s12, 2
        // Predicated region
        $region41: #{tpu_custom_call.1} parent=39 // pred_check
          %p785 = pneg %p133
        $region42: #{tpu_custom_call.1} parent=39 // pred_check_branch
          %787 = sbr.rel (%p785) target = $region44
        $region43: #{tpu_custom_call.1} parent=39 // pred_region
          %s788 = sand.u32 %s118, 1
          %s789 = scalar_lea.sflag [#allocation3], %s788
          %s790 = sand.u32 %s118, 1
          %s791 = smul.addr %s790, 64
          %s792 = scalar_lea.vmem [#allocation2], %s791
          %793 = dma.done %s789, 1024
        $region44: #{tpu_custom_call.1} parent=39 // pred_fallthru
          _
      $region40: #{tpu_custom_call.1} parent=5 // pred_fallthru
        _
    $region6: #{tpu_custom_call.1} parent=1 // loop_footer
      %s16 = sadd.s32 1, %s12
    $region7: #{tpu_custom_call.1} parent=1 // loop_footer_branch
      %11 = sbr.rel target = $region3
    $region8: #{tpu_custom_call.1} parent=1 // loop_exit
      _
    %794 = vsyncpa [#allocation3], 1
    %s795 = scalar_lea.sflag [#allocation3], 1
    %796 = vsyncpa %s795, 1

</llo_original>
